<compile_context>
chip_gen: v5e
topology: v5e:2x2
jax: 0.10.0
libtpu: 0.0.40
codegen_flags: <defaults>
</compile_context>

<pallas_src>
import math

import jax
import jax.numpy as jnp
from jax.experimental import pallas as pl
from jax.experimental.pallas import tpu as pltpu


# ----------------------------- tuning constants ------------------------------

_TILE_SOFT_BYTES = 2 * 1024 * 1024   # per-tile target: measured HBM sweet spot region
_TILE_HARD_BYTES = 8 * 1024 * 1024   # per-tile cap: 4x double-buffered = 32 MiB, v7x-safe
_ROW_BYTES_TARGET = 2048             # contiguous-DMA row length where gains saturate
_MAX_BATCH_BLOCK = 16                # bound trace-time unroll of per-slab transposes


# --------------------------------- kernel ------------------------------------

def _transpose_tiles_kernel(x_ref, o_ref):
    """x_ref: (tn, ta, tb) -> o_ref: (tn, tb, ta); per-slab 2-D XLU transpose.

    The loop is a trace-time unroll over the (small) batch block, so each
    iteration lowers to a plain, well-supported 2-D transpose.
    """
    # TODO(synk): packed-u32 bitcast fast path for bf16/fp8 tiles to halve XLU
    # transpose traffic (secondary: this kernel is HBM-bound, not XLU-bound).
    for i in range(x_ref.shape[0]):
        o_ref[i, :, :] = jnp.transpose(x_ref[i, :, :], (1, 0))


# ----------------------------- tile selection ---------------------------------

def _tile_candidates(dim):
    """Legal tile extents for one transpose axis.

    Both extents appear in a lane (last-dim) block position (input or output), so
    they must be a multiple of 128 or equal the full dim.
    """
    cands = {dim}
    if dim % 128 == 0:
        for t in range(128, dim, 128):
            if dim % t == 0:
                cands.add(t)
    return sorted(cands)


def _pick_tiles(a, b, itemsize):
    """Choose (ta, tb) by byte budget. Returns None if nothing fits the VMEM guard."""
    pairs = [
        (ta, tb)
        for ta in _tile_candidates(a)
        for tb in _tile_candidates(b)
        if ta * tb * itemsize <= _TILE_HARD_BYTES
    ]
    if not pairs:
        # TODO(synk): masked-edge tiling (pl.cdiv grid + masked stores) would let
        # large ragged dims stay on the Pallas path instead of the XLA fallback.
        return None

    def score(p):
        ta, tb = p
        nbytes = ta * tb * itemsize
        return (
            min(nbytes, _TILE_SOFT_BYTES),            # amortize per-step overhead
            min(ta * itemsize, _ROW_BYTES_TARGET),    # contiguous output-write rows
            min(tb * itemsize, _ROW_BYTES_TARGET),    # contiguous input-read rows
            -nbytes,                                  # then smallest VMEM footprint
            ta,                                       # leftover bias toward output lanes
        )

    return max(pairs, key=score)


# ------------------------------ pallas wrapper --------------------------------

def _pallas_rotation_permute(x, dims):
    """Pallas path for dims = (0, r+1..ndim-1, 1..r), i.e. a per-batch transpose.

    Returns None when the permutation/shape is better served by the XLA fallback.
    """
    ndim = x.ndim
    if ndim < 3 or dims[0] != 0:
        return None

    trailing = dims[1:]
    base = tuple(range(1, ndim))
    rot = None
    for r in range(1, len(base)):
        if trailing == base[r:] + base[:r]:
            rot = r
            break
    if rot is None:
        return None

    n = x.shape[0]
    a = math.prod(x.shape[1:1 + rot])
    b = math.prod(x.shape[1 + rot:])
    itemsize = jnp.dtype(x.dtype).itemsize

    # Sub-128 trailing dims (small-C conv permutes) would make the output block's
    # lane dim < 128 -> masked stores + tiny strided writeback DMAs. Let XLA do it.
    # TODO(synk): lane-dense flattened-output Pallas path for a < 128.
    if a < 128 or b < 128:
        return None

    picked = _pick_tiles(a, b, itemsize)
    if picked is None:
        return None
    ta, tb = picked
    na, nb = a // ta, b // tb

    # Block the leading batch dim when a whole (a, b) slab fits the tile budget,
    # so one grid step moves several slabs (fewer, larger DMAs).
    tn = 1
    if na == 1 and nb == 1 and n > 1:
        slab_bytes = a * b * itemsize
        cap = max(1, _TILE_SOFT_BYTES // slab_bytes)
        cap = min(cap, _MAX_BATCH_BLOCK, max(1, n // 2))  # keep >= 2 steps for v7x
        for cand in range(cap, 0, -1):
            if n % cand == 0:
                tn = cand
                break

    # Guarantee >= 2 grid steps when trivially possible so v7x can use both TCs.
    if (n // tn) * na * nb == 1:
        if ta % 256 == 0:
            ta //= 2
            na = 2
        elif tb % 256 == 0:
            tb //= 2
            nb = 2
        # TODO(synk): ragged single-slab shapes still run as one grid step.

    # Glue: contiguous reshape (no data movement); the kernel does the transpose.
    x3 = x.reshape(n, a, b)

    # 'a' tile index innermost -> consecutive steps write adjacent, lane-contiguous
    # output tiles.
    grid = (n // tn, nb, na)

    tile_bytes = tn * ta * tb * itemsize
    footprint = 4 * tile_bytes  # double-buffered input block + output block
    vmem_limit = int(min(48 * 1024 * 1024,
                         max(32 * 1024 * 1024, footprint + 8 * 1024 * 1024)))

    cost = pl.CostEstimate(
        flops=0,
        transcendentals=0,
        bytes_accessed=2 * n * a * b * itemsize,
    )

    y3 = pl.pallas_call(
        _transpose_tiles_kernel,
        out_shape=jax.ShapeDtypeStruct((n, b, a), x.dtype),
        grid=grid,
        # ta/tb are multiples of 128 or equal the full dims, so every last-two-dims
        # block position satisfies the (8, 128) tiling rule.
        in_specs=[pl.BlockSpec((tn, ta, tb), lambda bi, jb, ja: (bi, ja, jb))],
        out_specs=pl.BlockSpec((tn, tb, ta), lambda bi, jb, ja: (bi, jb, ja)),
        compiler_params=pltpu.CompilerParams(
            dimension_semantics=("parallel", "parallel", "parallel"),
            vmem_limit_bytes=vmem_limit,
        ),
        cost_estimate=cost,
    )(x3)

    out_shape_full = tuple(x.shape[d] for d in dims)
    return y3.reshape(out_shape_full)


def pallas_permute(x, dims):
    """JAX/Pallas equivalent of torch.permute(x, dims).

    Cyclic-rotation permutes of the trailing axes (dims[0] == 0) with large enough
    trailing dims run through the tiled Pallas transpose kernel; everything else
    (small/ragged shapes, arbitrary permutations) uses jnp.transpose, which keeps
    the exact forward semantics.
    """
    ndim = x.ndim
    dims = tuple(int(d) % ndim for d in dims)
    assert sorted(dims) == list(range(ndim)), "dims must be a permutation"

    if dims == tuple(range(ndim)):
        return x  # identity permutation

    out = _pallas_rotation_permute(x, dims)
    if out is not None:
        return out

    # TODO(synk): non-rotation permutations would need a sequence of 2-D
    # transposes; they (and small/ragged shapes) use the XLA transpose instead.
    return jnp.transpose(x, dims)


class Permute:
    """JAX/Pallas port of the PyTorch `Permute` nn.Module (no parameters)."""

    def __init__(self, dims):
        self.dims = list(dims)

    def __call__(self, x):
        return pallas_permute(x, self.dims)


if __name__ == "__main__":
    key = jax.random.PRNGKey(0)

    # Case 1: demo NCHW -> NHWC with small C (takes the small-dim XLA fallback).
    x = jax.random.normal(key, (2, 4, 16, 16), dtype=jnp.float32)
    y = jax.block_until_ready(Permute([0, 2, 3, 1])(x))
    ref = jnp.transpose(x, (0, 2, 3, 1))
    assert y.shape == ref.shape and y.dtype == ref.dtype
    assert bool(jnp.array_equal(y, ref)), "permute [0,2,3,1] mismatch"

    # Case 2: NHWC -> NCHW small C (other rotation direction, fallback).
    x2 = jax.random.normal(jax.random.PRNGKey(1), (2, 16, 16, 4), dtype=jnp.float32)
    y2 = jax.block_until_ready(Permute([0, 3, 1, 2])(x2))
    ref2 = jnp.transpose(x2, (0, 3, 1, 2))
    assert bool(jnp.array_equal(y2, ref2)), "permute [0,3,1,2] mismatch"

    # Case 3: large-C NCHW -> NHWC: tiled Pallas path (2 grid steps along 'a').
    x3 = jax.random.normal(jax.random.PRNGKey(2), (1, 512, 32, 32), dtype=jnp.float32)
    y3 = jax.block_until_ready(Permute([0, 2, 3, 1])(x3))
    ref3 = jnp.transpose(x3, (0, 2, 3, 1))
    assert bool(jnp.array_equal(y3, ref3)), "tiled permute mismatch"

    # Case 4: many small slabs -> batch-blocked Pallas path (tn > 1).
    x4 = jax.random.normal(jax.random.PRNGKey(3), (8, 128, 16, 16), dtype=jnp.float32)
    y4 = jax.block_until_ready(Permute([0, 2, 3, 1])(x4))
    ref4 = jnp.transpose(x4, (0, 2, 3, 1))
    assert bool(jnp.array_equal(y4, ref4)), "batch-blocked permute mismatch"

    # Case 5: bf16 exercises the dtype-aware byte-budget tiling.
    x5 = jax.random.normal(jax.random.PRNGKey(4), (2, 256, 16, 16), dtype=jnp.bfloat16)
    y5 = jax.block_until_ready(Permute([0, 2, 3, 1])(x5))
    ref5 = jnp.transpose(x5, (0, 2, 3, 1))
    assert bool(jnp.array_equal(y5, ref5)), "bf16 permute mismatch"

    print("KERNEL_OK")
</pallas_src>

<mosaic_0001>
module attributes {stable_mosaic.version = 11 : i64} {
  func.func @_transpose_tiles_kernel(%arg0: i32, %arg1: i32, %arg2: i32, %arg3: memref<1x256x1024xf32, #tpu.memory_space<vmem>>, %arg4: memref<1x1024x256xf32, #tpu.memory_space<vmem>>) attributes {dimension_semantics = [#tpu.dimension_semantics<parallel>, #tpu.dimension_semantics<parallel>, #tpu.dimension_semantics<parallel>], iteration_bounds = array<i64: 1, 1, 2>, scalar_prefetch = 0 : i64, scratch_operands = 0 : i64, tpu.core_type = #tpu.core_type<tc>, window_params = [{transform_indices = @transform_0, window_bounds = array<i64: 1, 256, 1024>}, {transform_indices = @transform_1, window_bounds = array<i64: 1, 1024, 256>}]} {
    %c0 = arith.constant 0 : index
    %c0_0 = arith.constant 0 : index
    %c0_1 = arith.constant 0 : index
    %0 = vector.load %arg3[%c0, %c0_0, %c0_1] : memref<1x256x1024xf32, #tpu.memory_space<vmem>>, vector<1x256x1024xf32>
    %1 = vector.shape_cast %0 : vector<1x256x1024xf32> to vector<256x1024xf32>
    %2 = tpu.transpose %1, [1, 0] : vector<256x1024xf32> -> vector<1024x256xf32>
    %c0_2 = arith.constant 0 : index
    %c0_3 = arith.constant 0 : index
    %c0_4 = arith.constant 0 : index
    %3 = vector.load %arg4[%c0_2, %c0_3, %c0_4] : memref<1x1024x256xf32, #tpu.memory_space<vmem>>, vector<1x1024x256xf32>
    %4 = vector.shape_cast %3 : vector<1x1024x256xf32> to vector<1024x256xf32>
    %5 = vector.shape_cast %2 : vector<1024x256xf32> to vector<1x1024x256xf32>
    tpu.vector_store %arg4[%c0_2, %c0_3, %c0_4], %5 {strides = array<i32>} : memref<1x1024x256xf32, #tpu.memory_space<vmem>>, vector<1x1024x256xf32>,
    return
  }
  func.func @transform_0(%arg0: i32, %arg1: i32, %arg2: i32) -> (i32, i32, i32) {
    %c0_i32 = arith.constant 0 : i32
    return %arg0, %arg2, %arg1 : i32, i32, i32
  }
  func.func @transform_1(%arg0: i32, %arg1: i32, %arg2: i32) -> (i32, i32, i32) {
    %c0_i32 = arith.constant 0 : i32
    return %arg0, %arg1, %arg2 : i32, i32, i32
  }
}

</mosaic_0001>

<llo_original>
// kernel: tpu_custom_call.1
$region0: #{tpu_custom_call.1}
  #allocation0 [shape = 'u32[]', space=smem, size = 0x4, offset = 0x4, fixed_abs, tag = 'smem constant byte address 0x4 - core index']
  #allocation1 [shape = 'u32[72,128]{1,0:T(1,128)}', space=vmem, size = 0x9000, scoped, tag = 'internal scratch']
  %s0 = inlined_call_operand.hbm [shape: f32[1,512,1024], index: 0, kind: input, shape index: {}]
  %s1 = inlined_call_operand.hbm [shape: f32[1,1024,512], index: 1, kind: output, shape index: {}]
  %s2 = sld [smem:[#allocation0]]
  $region41: #{tpu_custom_call.1} parent=0
    _
  %s4 = ssub.s32 1, %s2
  %s5 = scalar_select 0, %s4, %s2
  $region1: #{tpu_custom_call.1} parent=0
    #allocation2 [shape = 'u8[2097152]{0}', space=vmem, size = 0x200000, scoped, tag = 'input window, operand 0']
    #allocation3 [shape = 's32[2]{0}', space=sflag, size = 0x8, scoped, tag = 'scoped memory for tpu_custom_call.1']
    #allocation4 [shape = 's32[2]{0}', space=sflag, size = 0x8, scoped, tag = 'scoped memory for tpu_custom_call.1']
    #allocation5 [shape = 'u8[2097152]{0}', space=vmem, size = 0x200000, scoped, tag = 'output window, operand 0']
    %6 = vsyncpa [#allocation3], 0
    %s7 = scalar_lea.sflag [#allocation3], 1
    %8 = vsyncpa %s7, 0
    %9 = vsyncpa [#allocation4], 0
    %s10 = scalar_lea.sflag [#allocation4], 1
    %11 = vsyncpa %s10, 0
    loop: start=0, step=1, limit=4
    $region2: #{tpu_custom_call.1} parent=1 // loop_pre_header
      _
    $region3: #{tpu_custom_call.1} parent=1 // loop_header
      %s13 = sphi 0, %s17
      %p14 = scmp.ge.s32.totalorder %s13, 4
      %s20 = sphi 0, %s39
      %s21 = sphi 0, %s35
      %s22 = sphi 0, %s31
      %s23 = sphi 0, %s20
      %s24 = sphi 0, %s21
      %s25 = sphi 0, %s22
      %s26 = sphi 0, %s23
      %s27 = sphi 0, %s24
      %s28 = sphi 0, %s25
      %s46 = sphi 0, %s48
      %s49 = sphi 0, %s46
      %s50 = sphi 0, %s49
      %s66 = sphi 0, %s50
      %s76 = sphi 0, %s78
      %s79 = sphi 0, %s76
      %s80 = sphi 0, %s79
      %s96 = sphi 0, %s80
    $region4: #{tpu_custom_call.1} parent=1 // loop_header_branch
      %16 = sbr.rel (%p14) target = $region8
    $region5: #{tpu_custom_call.1} parent=1 // loop_body
      %s18 = ssub.s32 %s13, 1
      %s19 = ssub.s32 %s13, 2
      %s29 = sadd.s32 1, %s22
      %p30 = scmp.ge.s32.totalorder %s29, 2
      %s31 = scalar_select %p30, 0, %s29
      %s32 = sadd.s32 1, %s21
      %s33 = scalar_select %p30, %s32, %s21
      %p34 = scmp.ge.s32.totalorder %s33, 1
      %s35 = scalar_select %p34, 0, %s33
      %s36 = sadd.s32 1, %s20
      %s37 = scalar_select %p34, %s36, %s20
      %p38 = scmp.ge.s32.totalorder %s37, 1
      %s39 = scalar_select %p38, 0, %s37
      %s40 = ssub.s32 %s20, %s39
      %s41 = ssub.s32 %s22, %s31
      %s42 = sor.u32 %s40, %s41
      %s43 = ssub.s32 %s21, %s35
      %s44 = sor.u32 %s42, %s43
      %p45 = scmp.eq.s32.totalorder %s44, 0
      %s47 = sadd.s32 %s46, 1
      %s48 = scalar_select %p45, %s46, %s47
      %p51 = pneg %p45
      %p52 = scmp.eq.s32.totalorder %s13, 1
      %p53 = por %p51, %p52
      %p54 = scmp.ne.s32.totalorder %s46, %s49
      %p55 = scmp.eq.s32.totalorder %s13, 0
      %p56 = por %p54, %p55
      %p57 = scmp.ne.s32.totalorder %s46, %s49
      %p58 = scmp.eq.s32.totalorder %s18, 1
      %p59 = por %p57, %p58
      %p60 = scmp.ne.s32.totalorder %s49, %s50
      %p61 = scmp.eq.s32.totalorder %s18, 0
      %p62 = por %p60, %p61
      %p63 = scmp.ne.s32.totalorder %s49, %s50
      %p64 = scmp.eq.s32.totalorder %s19, 1
      %p65 = por %p63, %p64
      %p67 = scmp.ne.s32.totalorder %s50, %s66
      %p68 = scmp.eq.s32.totalorder %s19, 0
      %p69 = por %p67, %p68
      %s70 = ssub.s32 %s20, %s39
      %s71 = ssub.s32 %s21, %s35
      %s72 = sor.u32 %s70, %s71
      %s73 = ssub.s32 %s22, %s31
      %s74 = sor.u32 %s72, %s73
      %p75 = scmp.eq.s32.totalorder %s74, 0
      %s77 = sadd.s32 %s76, 1
      %s78 = scalar_select %p75, %s76, %s77
      %p81 = pneg %p75
      %p82 = scmp.eq.s32.totalorder %s13, 1
      %p83 = por %p81, %p82
      %p84 = scmp.ne.s32.totalorder %s76, %s79
      %p85 = scmp.eq.s32.totalorder %s13, 0
      %p86 = por %p84, %p85
      %p87 = scmp.ne.s32.totalorder %s76, %s79
      %p88 = scmp.eq.s32.totalorder %s18, 1
      %p89 = por %p87, %p88
      %p90 = scmp.ne.s32.totalorder %s79, %s80
      %p91 = scmp.eq.s32.totalorder %s18, 0
      %p92 = por %p90, %p91
      %p93 = scmp.ne.s32.totalorder %s79, %s80
      %p94 = scmp.eq.s32.totalorder %s19, 1
      %p95 = por %p93, %p94
      %p97 = scmp.ne.s32.totalorder %s80, %s96
      %p98 = scmp.eq.s32.totalorder %s19, 0
      %p99 = por %p97, %p98
      %p100 = scmp.le.s32.totalorder 1, %s13
      %p101 = scmp.lt.s32.totalorder %s13, 3
      %p102 = pnand %p100, %p101
      %p103 = pneg %p102
      // Predicated region
      $region9: #{tpu_custom_call.1} parent=5 // pred_check
        _
      $region10: #{tpu_custom_call.1} parent=5 // pred_check_branch
        %105 = sbr.rel (%p102) target = $region12
      $region11: #{tpu_custom_call.1} parent=5 // pred_region
        %s106 = ssub.s32 %s13, 1
      $region12: #{tpu_custom_call.1} parent=5 // pred_fallthru
        _
      %p107 = scmp.lt.s32.totalorder %s13, 2
      // Predicated region
      $region13: #{tpu_custom_call.1} parent=5 // pred_check
        %p108 = pneg %p107
      $region14: #{tpu_custom_call.1} parent=5 // pred_check_branch
        %110 = sbr.rel (%p108) target = $region16
      $region15: #{tpu_custom_call.1} parent=5 // pred_region
        // Predicated region
        $region17: #{tpu_custom_call.1} parent=15 // pred_check
          %p111 = pneg %p56
        $region18: #{tpu_custom_call.1} parent=15 // pred_check_branch
          %113 = sbr.rel (%p111) target = $region20
        $region19: #{tpu_custom_call.1} parent=15 // pred_region
          %s114 = sand.u32 %s46, 1
          %s115 = scalar_lea.sflag [#allocation3], %s114
          %s116 = sand.u32 %s46, 1
          %s117 = smul.addr %s116, 2048
          %s118 = scalar_lea.vmem [#allocation2], %s117
          %s119 = smul.u32 32, %s22
          %s120 = smul.u32 8, %s21
          %122 = vsyncadd %s115, 0
          %s123 = smul.addr %s119, 8
          %s124 = sadd.s32 %s120, %s123
          %s125 = smul.addr %s20, 512
          %s126 = sadd.s32 %s124, %s125
          %s127 = smul.addr %s126, 8
          %s128 = scalar_lea.hbm %s0, %s127
          %s129 = sshll.u32 %s128, 4
          %s130 = int_to_ptr.hbm [resolvable:$true] %s129
          %s131 = sshll.u32 %s118, 4
          %s132 = int_to_ptr.vmem [resolvable:$true] %s131
          %137 = dma.hbm_to_vmem [thread:$0]  %s130, 32768, %s132, %s115, 1024, 1024, 64
        $region20: #{tpu_custom_call.1} parent=15 // pred_fallthru
          _
      $region16: #{tpu_custom_call.1} parent=5 // pred_fallthru
        _
      %p138 = scmp.le.s32.totalorder 1, %s13
      %p139 = scmp.lt.s32.totalorder %s13, 3
      %p140 = pnand %p138, %p139
      %p141 = pneg %p140
      // Predicated region
      $region21: #{tpu_custom_call.1} parent=5 // pred_check
        _
      $region22: #{tpu_custom_call.1} parent=5 // pred_check_branch
        %143 = sbr.rel (%p140) target = $region24
      $region23: #{tpu_custom_call.1} parent=5 // pred_region
        %s144 = ssub.s32 %s13, 1
        %s145 = sand.u32 %s49, 1
        %s146 = scalar_lea.sflag [#allocation3], %s145
        %s147 = sand.u32 %s49, 1
        %s148 = smul.addr %s147, 2048
        %s149 = scalar_lea.vmem [#allocation2], %s148
        // Predicated region
        $region25: #{tpu_custom_call.1} parent=23 // pred_check
          %p150 = pneg %p62
        $region26: #{tpu_custom_call.1} parent=23 // pred_check_branch
          %152 = sbr.rel (%p150) target = $region28
        $region27: #{tpu_custom_call.1} parent=23 // pred_region
          %154 = dma.done %s146, 32768
        $region28: #{tpu_custom_call.1} parent=23 // pred_fallthru
          _
        %s155 = sand.u32 %s49, 1
        %s156 = scalar_lea.sflag [#allocation3], %s155
        %s157 = sand.u32 %s49, 1
        %s158 = smul.addr %s157, 2048
        %s159 = scalar_lea.vmem [#allocation2], %s158
        %p160 = pneg %p62
        %p161 = pneg %p59
        %p162 = pneg %p92
        %p163 = pneg %p89
        %s164 = sand.u32 %s79, 1
        %s165 = scalar_lea.sflag [#allocation4], %s164
        %s166 = sand.u32 %s79, 1
        %s167 = smul.addr %s166, 2048
        %s168 = scalar_lea.vmem [#allocation5], %s167
        %s169 = smul.u32 32, %s25
        %s170 = smul.u32 8, %s24
        %s171 = smul.u32 128, %s24
        %s172 = smul.u32 2, %s25
        %v173 = vld [vmem:[%s149] sm:$0xff]
        %v174 = vld [vmem:[%s149 + $0x8] sm:$0xff]
        %v175 = vld [vmem:[%s149 + $0x10] sm:$0xff]
        %v176 = vld [vmem:[%s149 + $0x18] sm:$0xff]
        %v177 = vld [vmem:[%s149 + $0x20] sm:$0xff]
        %v178 = vld [vmem:[%s149 + $0x28] sm:$0xff]
        %v179 = vld [vmem:[%s149 + $0x30] sm:$0xff]
        %v180 = vld [vmem:[%s149 + $0x38] sm:$0xff]
        %v181 = vld [vmem:[%s149 + $0x40] sm:$0xff]
        %v182 = vld [vmem:[%s149 + $0x48] sm:$0xff]
        %v183 = vld [vmem:[%s149 + $0x50] sm:$0xff]
        %v184 = vld [vmem:[%s149 + $0x58] sm:$0xff]
        %v185 = vld [vmem:[%s149 + $0x60] sm:$0xff]
        %v186 = vld [vmem:[%s149 + $0x68] sm:$0xff]
        %v187 = vld [vmem:[%s149 + $0x70] sm:$0xff]
        %v188 = vld [vmem:[%s149 + $0x78] sm:$0xff]
        %v189 = vld [vmem:[%s149 + $0x80] sm:$0xff]
        %v190 = vld [vmem:[%s149 + $0x88] sm:$0xff]
        %v191 = vld [vmem:[%s149 + $0x90] sm:$0xff]
        %v192 = vld [vmem:[%s149 + $0x98] sm:$0xff]
        %v193 = vld [vmem:[%s149 + $0xa0] sm:$0xff]
        %v194 = vld [vmem:[%s149 + $0xa8] sm:$0xff]
        %v195 = vld [vmem:[%s149 + $0xb0] sm:$0xff]
        %v196 = vld [vmem:[%s149 + $0xb8] sm:$0xff]
        %v197 = vld [vmem:[%s149 + $0xc0] sm:$0xff]
        %v198 = vld [vmem:[%s149 + $0xc8] sm:$0xff]
        %v199 = vld [vmem:[%s149 + $0xd0] sm:$0xff]
        %v200 = vld [vmem:[%s149 + $0xd8] sm:$0xff]
        %v201 = vld [vmem:[%s149 + $0xe0] sm:$0xff]
        %v202 = vld [vmem:[%s149 + $0xe8] sm:$0xff]
        %v203 = vld [vmem:[%s149 + $0xf0] sm:$0xff]
        %v204 = vld [vmem:[%s149 + $0xf8] sm:$0xff]
        %v205 = vld [vmem:[%s149 + $0x100] sm:$0xff]
        %v206 = vld [vmem:[%s149 + $0x108] sm:$0xff]
        %v207 = vld [vmem:[%s149 + $0x110] sm:$0xff]
        %v208 = vld [vmem:[%s149 + $0x118] sm:$0xff]
        %v209 = vld [vmem:[%s149 + $0x120] sm:$0xff]
        %v210 = vld [vmem:[%s149 + $0x128] sm:$0xff]
        %v211 = vld [vmem:[%s149 + $0x130] sm:$0xff]
        %v212 = vld [vmem:[%s149 + $0x138] sm:$0xff]
        %v213 = vld [vmem:[%s149 + $0x140] sm:$0xff]
        %v214 = vld [vmem:[%s149 + $0x148] sm:$0xff]
        %v215 = vld [vmem:[%s149 + $0x150] sm:$0xff]
        %v216 = vld [vmem:[%s149 + $0x158] sm:$0xff]
        %v217 = vld [vmem:[%s149 + $0x160] sm:$0xff]
        %v218 = vld [vmem:[%s149 + $0x168] sm:$0xff]
        %v219 = vld [vmem:[%s149 + $0x170] sm:$0xff]
        %v220 = vld [vmem:[%s149 + $0x178] sm:$0xff]
        %v221 = vld [vmem:[%s149 + $0x180] sm:$0xff]
        %v222 = vld [vmem:[%s149 + $0x188] sm:$0xff]
        %v223 = vld [vmem:[%s149 + $0x190] sm:$0xff]
        %v224 = vld [vmem:[%s149 + $0x198] sm:$0xff]
        %v225 = vld [vmem:[%s149 + $0x1a0] sm:$0xff]
        %v226 = vld [vmem:[%s149 + $0x1a8] sm:$0xff]
        %v227 = vld [vmem:[%s149 + $0x1b0] sm:$0xff]
        %v228 = vld [vmem:[%s149 + $0x1b8] sm:$0xff]
        %v229 = vld [vmem:[%s149 + $0x1c0] sm:$0xff]
        %v230 = vld [vmem:[%s149 + $0x1c8] sm:$0xff]
        %v231 = vld [vmem:[%s149 + $0x1d0] sm:$0xff]
        %v232 = vld [vmem:[%s149 + $0x1d8] sm:$0xff]
        %v233 = vld [vmem:[%s149 + $0x1e0] sm:$0xff]
        %v234 = vld [vmem:[%s149 + $0x1e8] sm:$0xff]
        %v235 = vld [vmem:[%s149 + $0x1f0] sm:$0xff]
        %v236 = vld [vmem:[%s149 + $0x1f8] sm:$0xff]
        %v237 = vld [vmem:[%s149 + $0x200] sm:$0xff]
        %v238 = vld [vmem:[%s149 + $0x208] sm:$0xff]
        %v239 = vld [vmem:[%s149 + $0x210] sm:$0xff]
        %v240 = vld [vmem:[%s149 + $0x218] sm:$0xff]
        %v241 = vld [vmem:[%s149 + $0x220] sm:$0xff]
        %v242 = vld [vmem:[%s149 + $0x228] sm:$0xff]
        %v243 = vld [vmem:[%s149 + $0x230] sm:$0xff]
        %v244 = vld [vmem:[%s149 + $0x238] sm:$0xff]
        %v245 = vld [vmem:[%s149 + $0x240] sm:$0xff]
        %v246 = vld [vmem:[%s149 + $0x248] sm:$0xff]
        %v247 = vld [vmem:[%s149 + $0x250] sm:$0xff]
        %v248 = vld [vmem:[%s149 + $0x258] sm:$0xff]
        %v249 = vld [vmem:[%s149 + $0x260] sm:$0xff]
        %v250 = vld [vmem:[%s149 + $0x268] sm:$0xff]
        %v251 = vld [vmem:[%s149 + $0x270] sm:$0xff]
        %v252 = vld [vmem:[%s149 + $0x278] sm:$0xff]
        %v253 = vld [vmem:[%s149 + $0x280] sm:$0xff]
        %v254 = vld [vmem:[%s149 + $0x288] sm:$0xff]
        %v255 = vld [vmem:[%s149 + $0x290] sm:$0xff]
        %v256 = vld [vmem:[%s149 + $0x298] sm:$0xff]
        %v257 = vld [vmem:[%s149 + $0x2a0] sm:$0xff]
        %v258 = vld [vmem:[%s149 + $0x2a8] sm:$0xff]
        %v259 = vld [vmem:[%s149 + $0x2b0] sm:$0xff]
        %v260 = vld [vmem:[%s149 + $0x2b8] sm:$0xff]
        %v261 = vld [vmem:[%s149 + $0x2c0] sm:$0xff]
        %v262 = vld [vmem:[%s149 + $0x2c8] sm:$0xff]
        %v263 = vld [vmem:[%s149 + $0x2d0] sm:$0xff]
        %v264 = vld [vmem:[%s149 + $0x2d8] sm:$0xff]
        %v265 = vld [vmem:[%s149 + $0x2e0] sm:$0xff]
        %v266 = vld [vmem:[%s149 + $0x2e8] sm:$0xff]
        %v267 = vld [vmem:[%s149 + $0x2f0] sm:$0xff]
        %v268 = vld [vmem:[%s149 + $0x2f8] sm:$0xff]
        %v269 = vld [vmem:[%s149 + $0x300] sm:$0xff]
        %v270 = vld [vmem:[%s149 + $0x308] sm:$0xff]
        %v271 = vld [vmem:[%s149 + $0x310] sm:$0xff]
        %v272 = vld [vmem:[%s149 + $0x318] sm:$0xff]
        %v273 = vld [vmem:[%s149 + $0x320] sm:$0xff]
        %v274 = vld [vmem:[%s149 + $0x328] sm:$0xff]
        %v275 = vld [vmem:[%s149 + $0x330] sm:$0xff]
        %v276 = vld [vmem:[%s149 + $0x338] sm:$0xff]
        %v277 = vld [vmem:[%s149 + $0x340] sm:$0xff]
        %v278 = vld [vmem:[%s149 + $0x348] sm:$0xff]
        %v279 = vld [vmem:[%s149 + $0x350] sm:$0xff]
        %v280 = vld [vmem:[%s149 + $0x358] sm:$0xff]
        %v281 = vld [vmem:[%s149 + $0x360] sm:$0xff]
        %v282 = vld [vmem:[%s149 + $0x368] sm:$0xff]
        %v283 = vld [vmem:[%s149 + $0x370] sm:$0xff]
        %v284 = vld [vmem:[%s149 + $0x378] sm:$0xff]
        %v285 = vld [vmem:[%s149 + $0x380] sm:$0xff]
        %v286 = vld [vmem:[%s149 + $0x388] sm:$0xff]
        %v287 = vld [vmem:[%s149 + $0x390] sm:$0xff]
        %v288 = vld [vmem:[%s149 + $0x398] sm:$0xff]
        %v289 = vld [vmem:[%s149 + $0x3a0] sm:$0xff]
        %v290 = vld [vmem:[%s149 + $0x3a8] sm:$0xff]
        %v291 = vld [vmem:[%s149 + $0x3b0] sm:$0xff]
        %v292 = vld [vmem:[%s149 + $0x3b8] sm:$0xff]
        %v293 = vld [vmem:[%s149 + $0x3c0] sm:$0xff]
        %v294 = vld [vmem:[%s149 + $0x3c8] sm:$0xff]
        %v295 = vld [vmem:[%s149 + $0x3d0] sm:$0xff]
        %v296 = vld [vmem:[%s149 + $0x3d8] sm:$0xff]
        %v297 = vld [vmem:[%s149 + $0x3e0] sm:$0xff]
        %v298 = vld [vmem:[%s149 + $0x3e8] sm:$0xff]
        %v299 = vld [vmem:[%s149 + $0x3f0] sm:$0xff]
        %v300 = vld [vmem:[%s149 + $0x3f8] sm:$0xff]
        %v301 = vld [vmem:[%s149 + $0x400] sm:$0xff]
        %v302 = vld [vmem:[%s149 + $0x408] sm:$0xff]
        %v303 = vld [vmem:[%s149 + $0x410] sm:$0xff]
        %v304 = vld [vmem:[%s149 + $0x418] sm:$0xff]
        %v305 = vld [vmem:[%s149 + $0x420] sm:$0xff]
        %v306 = vld [vmem:[%s149 + $0x428] sm:$0xff]
        %v307 = vld [vmem:[%s149 + $0x430] sm:$0xff]
        %v308 = vld [vmem:[%s149 + $0x438] sm:$0xff]
        %v309 = vld [vmem:[%s149 + $0x440] sm:$0xff]
        %v310 = vld [vmem:[%s149 + $0x448] sm:$0xff]
        %v311 = vld [vmem:[%s149 + $0x450] sm:$0xff]
        %v312 = vld [vmem:[%s149 + $0x458] sm:$0xff]
        %v313 = vld [vmem:[%s149 + $0x460] sm:$0xff]
        %v314 = vld [vmem:[%s149 + $0x468] sm:$0xff]
        %v315 = vld [vmem:[%s149 + $0x470] sm:$0xff]
        %v316 = vld [vmem:[%s149 + $0x478] sm:$0xff]
        %v317 = vld [vmem:[%s149 + $0x480] sm:$0xff]
        %v318 = vld [vmem:[%s149 + $0x488] sm:$0xff]
        %v319 = vld [vmem:[%s149 + $0x490] sm:$0xff]
        %v320 = vld [vmem:[%s149 + $0x498] sm:$0xff]
        %v321 = vld [vmem:[%s149 + $0x4a0] sm:$0xff]
        %v322 = vld [vmem:[%s149 + $0x4a8] sm:$0xff]
        %v323 = vld [vmem:[%s149 + $0x4b0] sm:$0xff]
        %v324 = vld [vmem:[%s149 + $0x4b8] sm:$0xff]
        %v325 = vld [vmem:[%s149 + $0x4c0] sm:$0xff]
        %v326 = vld [vmem:[%s149 + $0x4c8] sm:$0xff]
        %v327 = vld [vmem:[%s149 + $0x4d0] sm:$0xff]
        %v328 = vld [vmem:[%s149 + $0x4d8] sm:$0xff]
        %v329 = vld [vmem:[%s149 + $0x4e0] sm:$0xff]
        %v330 = vld [vmem:[%s149 + $0x4e8] sm:$0xff]
        %v331 = vld [vmem:[%s149 + $0x4f0] sm:$0xff]
        %v332 = vld [vmem:[%s149 + $0x4f8] sm:$0xff]
        %v333 = vld [vmem:[%s149 + $0x500] sm:$0xff]
        %v334 = vld [vmem:[%s149 + $0x508] sm:$0xff]
        %v335 = vld [vmem:[%s149 + $0x510] sm:$0xff]
        %v336 = vld [vmem:[%s149 + $0x518] sm:$0xff]
        %v337 = vld [vmem:[%s149 + $0x520] sm:$0xff]
        %v338 = vld [vmem:[%s149 + $0x528] sm:$0xff]
        %v339 = vld [vmem:[%s149 + $0x530] sm:$0xff]
        %v340 = vld [vmem:[%s149 + $0x538] sm:$0xff]
        %v341 = vld [vmem:[%s149 + $0x540] sm:$0xff]
        %v342 = vld [vmem:[%s149 + $0x548] sm:$0xff]
        %v343 = vld [vmem:[%s149 + $0x550] sm:$0xff]
        %v344 = vld [vmem:[%s149 + $0x558] sm:$0xff]
        %v345 = vld [vmem:[%s149 + $0x560] sm:$0xff]
        %v346 = vld [vmem:[%s149 + $0x568] sm:$0xff]
        %v347 = vld [vmem:[%s149 + $0x570] sm:$0xff]
        %v348 = vld [vmem:[%s149 + $0x578] sm:$0xff]
        %v349 = vld [vmem:[%s149 + $0x580] sm:$0xff]
        %v350 = vld [vmem:[%s149 + $0x588] sm:$0xff]
        %v351 = vld [vmem:[%s149 + $0x590] sm:$0xff]
        %v352 = vld [vmem:[%s149 + $0x598] sm:$0xff]
        %v353 = vld [vmem:[%s149 + $0x5a0] sm:$0xff]
        %v354 = vld [vmem:[%s149 + $0x5a8] sm:$0xff]
        %v355 = vld [vmem:[%s149 + $0x5b0] sm:$0xff]
        %v356 = vld [vmem:[%s149 + $0x5b8] sm:$0xff]
        %v357 = vld [vmem:[%s149 + $0x5c0] sm:$0xff]
        %v358 = vld [vmem:[%s149 + $0x5c8] sm:$0xff]
        %v359 = vld [vmem:[%s149 + $0x5d0] sm:$0xff]
        %v360 = vld [vmem:[%s149 + $0x5d8] sm:$0xff]
        %v361 = vld [vmem:[%s149 + $0x5e0] sm:$0xff]
        %v362 = vld [vmem:[%s149 + $0x5e8] sm:$0xff]
        %v363 = vld [vmem:[%s149 + $0x5f0] sm:$0xff]
        %v364 = vld [vmem:[%s149 + $0x5f8] sm:$0xff]
        %v365 = vld [vmem:[%s149 + $0x600] sm:$0xff]
        %v366 = vld [vmem:[%s149 + $0x608] sm:$0xff]
        %v367 = vld [vmem:[%s149 + $0x610] sm:$0xff]
        %v368 = vld [vmem:[%s149 + $0x618] sm:$0xff]
        %v369 = vld [vmem:[%s149 + $0x620] sm:$0xff]
        %v370 = vld [vmem:[%s149 + $0x628] sm:$0xff]
        %v371 = vld [vmem:[%s149 + $0x630] sm:$0xff]
        %v372 = vld [vmem:[%s149 + $0x638] sm:$0xff]
        %v373 = vld [vmem:[%s149 + $0x640] sm:$0xff]
        %v374 = vld [vmem:[%s149 + $0x648] sm:$0xff]
        %v375 = vld [vmem:[%s149 + $0x650] sm:$0xff]
        %v376 = vld [vmem:[%s149 + $0x658] sm:$0xff]
        %v377 = vld [vmem:[%s149 + $0x660] sm:$0xff]
        %v378 = vld [vmem:[%s149 + $0x668] sm:$0xff]
        %v379 = vld [vmem:[%s149 + $0x670] sm:$0xff]
        %v380 = vld [vmem:[%s149 + $0x678] sm:$0xff]
        %v381 = vld [vmem:[%s149 + $0x680] sm:$0xff]
        %v382 = vld [vmem:[%s149 + $0x688] sm:$0xff]
        %v383 = vld [vmem:[%s149 + $0x690] sm:$0xff]
        %v384 = vld [vmem:[%s149 + $0x698] sm:$0xff]
        %v385 = vld [vmem:[%s149 + $0x6a0] sm:$0xff]
        %v386 = vld [vmem:[%s149 + $0x6a8] sm:$0xff]
        %v387 = vld [vmem:[%s149 + $0x6b0] sm:$0xff]
        %v388 = vld [vmem:[%s149 + $0x6b8] sm:$0xff]
        %v389 = vld [vmem:[%s149 + $0x6c0] sm:$0xff]
        %v390 = vld [vmem:[%s149 + $0x6c8] sm:$0xff]
        %v391 = vld [vmem:[%s149 + $0x6d0] sm:$0xff]
        %v392 = vld [vmem:[%s149 + $0x6d8] sm:$0xff]
        %v393 = vld [vmem:[%s149 + $0x6e0] sm:$0xff]
        %v394 = vld [vmem:[%s149 + $0x6e8] sm:$0xff]
        %v395 = vld [vmem:[%s149 + $0x6f0] sm:$0xff]
        %v396 = vld [vmem:[%s149 + $0x6f8] sm:$0xff]
        %v397 = vld [vmem:[%s149 + $0x700] sm:$0xff]
        %v398 = vld [vmem:[%s149 + $0x708] sm:$0xff]
        %v399 = vld [vmem:[%s149 + $0x710] sm:$0xff]
        %v400 = vld [vmem:[%s149 + $0x718] sm:$0xff]
        %v401 = vld [vmem:[%s149 + $0x720] sm:$0xff]
        %v402 = vld [vmem:[%s149 + $0x728] sm:$0xff]
        %v403 = vld [vmem:[%s149 + $0x730] sm:$0xff]
        %v404 = vld [vmem:[%s149 + $0x738] sm:$0xff]
        %v405 = vld [vmem:[%s149 + $0x740] sm:$0xff]
        %v406 = vld [vmem:[%s149 + $0x748] sm:$0xff]
        %v407 = vld [vmem:[%s149 + $0x750] sm:$0xff]
        %v408 = vld [vmem:[%s149 + $0x758] sm:$0xff]
        %v409 = vld [vmem:[%s149 + $0x760] sm:$0xff]
        %v410 = vld [vmem:[%s149 + $0x768] sm:$0xff]
        %v411 = vld [vmem:[%s149 + $0x770] sm:$0xff]
        %v412 = vld [vmem:[%s149 + $0x778] sm:$0xff]
        %v413 = vld [vmem:[%s149 + $0x780] sm:$0xff]
        %v414 = vld [vmem:[%s149 + $0x788] sm:$0xff]
        %v415 = vld [vmem:[%s149 + $0x790] sm:$0xff]
        %v416 = vld [vmem:[%s149 + $0x798] sm:$0xff]
        %v417 = vld [vmem:[%s149 + $0x7a0] sm:$0xff]
        %v418 = vld [vmem:[%s149 + $0x7a8] sm:$0xff]
        %v419 = vld [vmem:[%s149 + $0x7b0] sm:$0xff]
        %v420 = vld [vmem:[%s149 + $0x7b8] sm:$0xff]
        %v421 = vld [vmem:[%s149 + $0x7c0] sm:$0xff]
        %v422 = vld [vmem:[%s149 + $0x7c8] sm:$0xff]
        %v423 = vld [vmem:[%s149 + $0x7d0] sm:$0xff]
        %v424 = vld [vmem:[%s149 + $0x7d8] sm:$0xff]
        %v425 = vld [vmem:[%s149 + $0x7e0] sm:$0xff]
        %v426 = vld [vmem:[%s149 + $0x7e8] sm:$0xff]
        %v427 = vld [vmem:[%s149 + $0x7f0] sm:$0xff]
        %v428 = vld [vmem:[%s149 + $0x7f8] sm:$0xff]
        %429 = vxpose.xlu0.b32.start [1/16] %v173, 128
        %430 = vxpose.xlu0.b32.cont [2/16] %v181, 128
        %431 = vxpose.xlu0.b32.cont [3/16] %v189, 128
        %432 = vxpose.xlu0.b32.cont [4/16] %v197, 128
        %433 = vxpose.xlu0.b32.cont [5/16] %v205, 128
        %434 = vxpose.xlu0.b32.cont [6/16] %v213, 128
        %435 = vxpose.xlu0.b32.cont [7/16] %v221, 128
        %436 = vxpose.xlu0.b32.cont [8/16] %v229, 128
        %437 = vxpose.xlu0.b32.cont [9/16] %v237, 128
        %438 = vxpose.xlu0.b32.cont [10/16] %v245, 128
        %439 = vxpose.xlu0.b32.cont [11/16] %v253, 128
        %440 = vxpose.xlu0.b32.cont [12/16] %v261, 128
        %441 = vxpose.xlu0.b32.cont [13/16] %v269, 128
        %442 = vxpose.xlu0.b32.cont [14/16] %v277, 128
        %443 = vxpose.xlu0.b32.cont [15/16] %v285, 128
        %444 = vxpose.xlu0.b32.end [16/16] %v293, 128
        %v445 = vpop.trf.xlu0
        %v446 = vpop.trf.xlu0
        %v447 = vpop.trf.xlu0
        %v448 = vpop.trf.xlu0
        %v449 = vpop.trf.xlu0
        %v450 = vpop.trf.xlu0
        %v451 = vpop.trf.xlu0
        %v452 = vpop.trf.xlu0
        %v453 = vpop.trf.xlu0
        %v454 = vpop.trf.xlu0
        %v455 = vpop.trf.xlu0
        %v456 = vpop.trf.xlu0
        %v457 = vpop.trf.xlu0
        %v458 = vpop.trf.xlu0
        %v459 = vpop.trf.xlu0
        %v460 = vpop.trf.xlu0
        %461 = vxpose.xlu0.b32.start [1/16] %v174, 128
        %462 = vxpose.xlu0.b32.cont [2/16] %v182, 128
        %463 = vxpose.xlu0.b32.cont [3/16] %v190, 128
        %464 = vxpose.xlu0.b32.cont [4/16] %v198, 128
        %465 = vxpose.xlu0.b32.cont [5/16] %v206, 128
        %466 = vxpose.xlu0.b32.cont [6/16] %v214, 128
        %467 = vxpose.xlu0.b32.cont [7/16] %v222, 128
        %468 = vxpose.xlu0.b32.cont [8/16] %v230, 128
        %469 = vxpose.xlu0.b32.cont [9/16] %v238, 128
        %470 = vxpose.xlu0.b32.cont [10/16] %v246, 128
        %471 = vxpose.xlu0.b32.cont [11/16] %v254, 128
        %472 = vxpose.xlu0.b32.cont [12/16] %v262, 128
        %473 = vxpose.xlu0.b32.cont [13/16] %v270, 128
        %474 = vxpose.xlu0.b32.cont [14/16] %v278, 128
        %475 = vxpose.xlu0.b32.cont [15/16] %v286, 128
        %476 = vxpose.xlu0.b32.end [16/16] %v294, 128
        %v477 = vpop.trf.xlu0
        %v478 = vpop.trf.xlu0
        %v479 = vpop.trf.xlu0
        %v480 = vpop.trf.xlu0
        %v481 = vpop.trf.xlu0
        %v482 = vpop.trf.xlu0
        %v483 = vpop.trf.xlu0
        %v484 = vpop.trf.xlu0
        %v485 = vpop.trf.xlu0
        %v486 = vpop.trf.xlu0
        %v487 = vpop.trf.xlu0
        %v488 = vpop.trf.xlu0
        %v489 = vpop.trf.xlu0
        %v490 = vpop.trf.xlu0
        %v491 = vpop.trf.xlu0
        %v492 = vpop.trf.xlu0
        %493 = vxpose.xlu0.b32.start [1/16] %v175, 128
        %494 = vxpose.xlu0.b32.cont [2/16] %v183, 128
        %495 = vxpose.xlu0.b32.cont [3/16] %v191, 128
        %496 = vxpose.xlu0.b32.cont [4/16] %v199, 128
        %497 = vxpose.xlu0.b32.cont [5/16] %v207, 128
        %498 = vxpose.xlu0.b32.cont [6/16] %v215, 128
        %499 = vxpose.xlu0.b32.cont [7/16] %v223, 128
        %500 = vxpose.xlu0.b32.cont [8/16] %v231, 128
        %501 = vxpose.xlu0.b32.cont [9/16] %v239, 128
        %502 = vxpose.xlu0.b32.cont [10/16] %v247, 128
        %503 = vxpose.xlu0.b32.cont [11/16] %v255, 128
        %504 = vxpose.xlu0.b32.cont [12/16] %v263, 128
        %505 = vxpose.xlu0.b32.cont [13/16] %v271, 128
        %506 = vxpose.xlu0.b32.cont [14/16] %v279, 128
        %507 = vxpose.xlu0.b32.cont [15/16] %v287, 128
        %508 = vxpose.xlu0.b32.end [16/16] %v295, 128
        %v509 = vpop.trf.xlu0
        %v510 = vpop.trf.xlu0
        %v511 = vpop.trf.xlu0
        %v512 = vpop.trf.xlu0
        %v513 = vpop.trf.xlu0
        %v514 = vpop.trf.xlu0
        %v515 = vpop.trf.xlu0
        %v516 = vpop.trf.xlu0
        %v517 = vpop.trf.xlu0
        %v518 = vpop.trf.xlu0
        %v519 = vpop.trf.xlu0
        %v520 = vpop.trf.xlu0
        %v521 = vpop.trf.xlu0
        %v522 = vpop.trf.xlu0
        %v523 = vpop.trf.xlu0
        %v524 = vpop.trf.xlu0
        %525 = vxpose.xlu0.b32.start [1/16] %v176, 128
        %526 = vxpose.xlu0.b32.cont [2/16] %v184, 128
        %527 = vxpose.xlu0.b32.cont [3/16] %v192, 128
        %528 = vxpose.xlu0.b32.cont [4/16] %v200, 128
        %529 = vxpose.xlu0.b32.cont [5/16] %v208, 128
        %530 = vxpose.xlu0.b32.cont [6/16] %v216, 128
        %531 = vxpose.xlu0.b32.cont [7/16] %v224, 128
        %532 = vxpose.xlu0.b32.cont [8/16] %v232, 128
        %533 = vxpose.xlu0.b32.cont [9/16] %v240, 128
        %534 = vxpose.xlu0.b32.cont [10/16] %v248, 128
        %535 = vxpose.xlu0.b32.cont [11/16] %v256, 128
        %536 = vxpose.xlu0.b32.cont [12/16] %v264, 128
        %537 = vxpose.xlu0.b32.cont [13/16] %v272, 128
        %538 = vxpose.xlu0.b32.cont [14/16] %v280, 128
        %539 = vxpose.xlu0.b32.cont [15/16] %v288, 128
        %540 = vxpose.xlu0.b32.end [16/16] %v296, 128
        %v541 = vpop.trf.xlu0
        %v542 = vpop.trf.xlu0
        %v543 = vpop.trf.xlu0
        %v544 = vpop.trf.xlu0
        %v545 = vpop.trf.xlu0
        %v546 = vpop.trf.xlu0
        %v547 = vpop.trf.xlu0
        %v548 = vpop.trf.xlu0
        %v549 = vpop.trf.xlu0
        %v550 = vpop.trf.xlu0
        %v551 = vpop.trf.xlu0
        %v552 = vpop.trf.xlu0
        %v553 = vpop.trf.xlu0
        %v554 = vpop.trf.xlu0
        %v555 = vpop.trf.xlu0
        %v556 = vpop.trf.xlu0
        %557 = vxpose.xlu0.b32.start [1/16] %v177, 128
        %558 = vxpose.xlu0.b32.cont [2/16] %v185, 128
        %559 = vxpose.xlu0.b32.cont [3/16] %v193, 128
        %560 = vxpose.xlu0.b32.cont [4/16] %v201, 128
        %561 = vxpose.xlu0.b32.cont [5/16] %v209, 128
        %562 = vxpose.xlu0.b32.cont [6/16] %v217, 128
        %563 = vxpose.xlu0.b32.cont [7/16] %v225, 128
        %564 = vxpose.xlu0.b32.cont [8/16] %v233, 128
        %565 = vxpose.xlu0.b32.cont [9/16] %v241, 128
        %566 = vxpose.xlu0.b32.cont [10/16] %v249, 128
        %567 = vxpose.xlu0.b32.cont [11/16] %v257, 128
        %568 = vxpose.xlu0.b32.cont [12/16] %v265, 128
        %569 = vxpose.xlu0.b32.cont [13/16] %v273, 128
        %570 = vxpose.xlu0.b32.cont [14/16] %v281, 128
        %571 = vxpose.xlu0.b32.cont [15/16] %v289, 128
        %572 = vxpose.xlu0.b32.end [16/16] %v297, 128
        %v573 = vpop.trf.xlu0
        %v574 = vpop.trf.xlu0
        %v575 = vpop.trf.xlu0
        %v576 = vpop.trf.xlu0
        %v577 = vpop.trf.xlu0
        %v578 = vpop.trf.xlu0
        %v579 = vpop.trf.xlu0
        %v580 = vpop.trf.xlu0
        %v581 = vpop.trf.xlu0
        %v582 = vpop.trf.xlu0
        %v583 = vpop.trf.xlu0
        %v584 = vpop.trf.xlu0
        %v585 = vpop.trf.xlu0
        %v586 = vpop.trf.xlu0
        %v587 = vpop.trf.xlu0
        %v588 = vpop.trf.xlu0
        %589 = vxpose.xlu0.b32.start [1/16] %v178, 128
        %590 = vxpose.xlu0.b32.cont [2/16] %v186, 128
        %591 = vxpose.xlu0.b32.cont [3/16] %v194, 128
        %592 = vxpose.xlu0.b32.cont [4/16] %v202, 128
        %593 = vxpose.xlu0.b32.cont [5/16] %v210, 128
        %594 = vxpose.xlu0.b32.cont [6/16] %v218, 128
        %595 = vxpose.xlu0.b32.cont [7/16] %v226, 128
        %596 = vxpose.xlu0.b32.cont [8/16] %v234, 128
        %597 = vxpose.xlu0.b32.cont [9/16] %v242, 128
        %598 = vxpose.xlu0.b32.cont [10/16] %v250, 128
        %599 = vxpose.xlu0.b32.cont [11/16] %v258, 128
        %600 = vxpose.xlu0.b32.cont [12/16] %v266, 128
        %601 = vxpose.xlu0.b32.cont [13/16] %v274, 128
        %602 = vxpose.xlu0.b32.cont [14/16] %v282, 128
        %603 = vxpose.xlu0.b32.cont [15/16] %v290, 128
        %604 = vxpose.xlu0.b32.end [16/16] %v298, 128
        %v605 = vpop.trf.xlu0
        %v606 = vpop.trf.xlu0
        %v607 = vpop.trf.xlu0
        %v608 = vpop.trf.xlu0
        %v609 = vpop.trf.xlu0
        %v610 = vpop.trf.xlu0
        %v611 = vpop.trf.xlu0
        %v612 = vpop.trf.xlu0
        %v613 = vpop.trf.xlu0
        %v614 = vpop.trf.xlu0
        %v615 = vpop.trf.xlu0
        %v616 = vpop.trf.xlu0
        %v617 = vpop.trf.xlu0
        %v618 = vpop.trf.xlu0
        %v619 = vpop.trf.xlu0
        %v620 = vpop.trf.xlu0
        %621 = vxpose.xlu0.b32.start [1/16] %v179, 128
        %622 = vxpose.xlu0.b32.cont [2/16] %v187, 128
        %623 = vxpose.xlu0.b32.cont [3/16] %v195, 128
        %624 = vxpose.xlu0.b32.cont [4/16] %v203, 128
        %625 = vxpose.xlu0.b32.cont [5/16] %v211, 128
        %626 = vxpose.xlu0.b32.cont [6/16] %v219, 128
        %627 = vxpose.xlu0.b32.cont [7/16] %v227, 128
        %628 = vxpose.xlu0.b32.cont [8/16] %v235, 128
        %629 = vxpose.xlu0.b32.cont [9/16] %v243, 128
        %630 = vxpose.xlu0.b32.cont [10/16] %v251, 128
        %631 = vxpose.xlu0.b32.cont [11/16] %v259, 128
        %632 = vxpose.xlu0.b32.cont [12/16] %v267, 128
        %633 = vxpose.xlu0.b32.cont [13/16] %v275, 128
        %634 = vxpose.xlu0.b32.cont [14/16] %v283, 128
        %635 = vxpose.xlu0.b32.cont [15/16] %v291, 128
        %636 = vxpose.xlu0.b32.end [16/16] %v299, 128
        %v637 = vpop.trf.xlu0
        %v638 = vpop.trf.xlu0
        %v639 = vpop.trf.xlu0
        %v640 = vpop.trf.xlu0
        %v641 = vpop.trf.xlu0
        %v642 = vpop.trf.xlu0
        %v643 = vpop.trf.xlu0
        %v644 = vpop.trf.xlu0
        %v645 = vpop.trf.xlu0
        %v646 = vpop.trf.xlu0
        %v647 = vpop.trf.xlu0
        %v648 = vpop.trf.xlu0
        %v649 = vpop.trf.xlu0
        %v650 = vpop.trf.xlu0
        %v651 = vpop.trf.xlu0
        %v652 = vpop.trf.xlu0
        %653 = vxpose.xlu0.b32.start [1/16] %v180, 128
        %654 = vxpose.xlu0.b32.cont [2/16] %v188, 128
        %655 = vxpose.xlu0.b32.cont [3/16] %v196, 128
        %656 = vxpose.xlu0.b32.cont [4/16] %v204, 128
        %657 = vxpose.xlu0.b32.cont [5/16] %v212, 128
        %658 = vxpose.xlu0.b32.cont [6/16] %v220, 128
        %659 = vxpose.xlu0.b32.cont [7/16] %v228, 128
        %660 = vxpose.xlu0.b32.cont [8/16] %v236, 128
        %661 = vxpose.xlu0.b32.cont [9/16] %v244, 128
        %662 = vxpose.xlu0.b32.cont [10/16] %v252, 128
        %663 = vxpose.xlu0.b32.cont [11/16] %v260, 128
        %664 = vxpose.xlu0.b32.cont [12/16] %v268, 128
        %665 = vxpose.xlu0.b32.cont [13/16] %v276, 128
        %666 = vxpose.xlu0.b32.cont [14/16] %v284, 128
        %667 = vxpose.xlu0.b32.cont [15/16] %v292, 128
        %668 = vxpose.xlu0.b32.end [16/16] %v300, 128
        %v669 = vpop.trf.xlu0
        %v670 = vpop.trf.xlu0
        %v671 = vpop.trf.xlu0
        %v672 = vpop.trf.xlu0
        %v673 = vpop.trf.xlu0
        %v674 = vpop.trf.xlu0
        %v675 = vpop.trf.xlu0
        %v676 = vpop.trf.xlu0
        %v677 = vpop.trf.xlu0
        %v678 = vpop.trf.xlu0
        %v679 = vpop.trf.xlu0
        %v680 = vpop.trf.xlu0
        %v681 = vpop.trf.xlu0
        %v682 = vpop.trf.xlu0
        %v683 = vpop.trf.xlu0
        %v684 = vpop.trf.xlu0
        %685 = vxpose.xlu0.b32.start [1/16] %v301, 128
        %686 = vxpose.xlu0.b32.cont [2/16] %v309, 128
        %687 = vxpose.xlu0.b32.cont [3/16] %v317, 128
        %688 = vxpose.xlu0.b32.cont [4/16] %v325, 128
        %689 = vxpose.xlu0.b32.cont [5/16] %v333, 128
        %690 = vxpose.xlu0.b32.cont [6/16] %v341, 128
        %691 = vxpose.xlu0.b32.cont [7/16] %v349, 128
        %692 = vxpose.xlu0.b32.cont [8/16] %v357, 128
        %693 = vxpose.xlu0.b32.cont [9/16] %v365, 128
        %694 = vxpose.xlu0.b32.cont [10/16] %v373, 128
        %695 = vxpose.xlu0.b32.cont [11/16] %v381, 128
        %696 = vxpose.xlu0.b32.cont [12/16] %v389, 128
        %697 = vxpose.xlu0.b32.cont [13/16] %v397, 128
        %698 = vxpose.xlu0.b32.cont [14/16] %v405, 128
        %699 = vxpose.xlu0.b32.cont [15/16] %v413, 128
        %700 = vxpose.xlu0.b32.end [16/16] %v421, 128
        %v701 = vpop.trf.xlu0
        %v702 = vpop.trf.xlu0
        %v703 = vpop.trf.xlu0
        %v704 = vpop.trf.xlu0
        %v705 = vpop.trf.xlu0
        %v706 = vpop.trf.xlu0
        %v707 = vpop.trf.xlu0
        %v708 = vpop.trf.xlu0
        %v709 = vpop.trf.xlu0
        %v710 = vpop.trf.xlu0
        %v711 = vpop.trf.xlu0
        %v712 = vpop.trf.xlu0
        %v713 = vpop.trf.xlu0
        %v714 = vpop.trf.xlu0
        %v715 = vpop.trf.xlu0
        %v716 = vpop.trf.xlu0
        %717 = vxpose.xlu0.b32.start [1/16] %v302, 128
        %718 = vxpose.xlu0.b32.cont [2/16] %v310, 128
        %719 = vxpose.xlu0.b32.cont [3/16] %v318, 128
        %720 = vxpose.xlu0.b32.cont [4/16] %v326, 128
        %721 = vxpose.xlu0.b32.cont [5/16] %v334, 128
        %722 = vxpose.xlu0.b32.cont [6/16] %v342, 128
        %723 = vxpose.xlu0.b32.cont [7/16] %v350, 128
        %724 = vxpose.xlu0.b32.cont [8/16] %v358, 128
        %725 = vxpose.xlu0.b32.cont [9/16] %v366, 128
        %726 = vxpose.xlu0.b32.cont [10/16] %v374, 128
        %727 = vxpose.xlu0.b32.cont [11/16] %v382, 128
        %728 = vxpose.xlu0.b32.cont [12/16] %v390, 128
        %729 = vxpose.xlu0.b32.cont [13/16] %v398, 128
        %730 = vxpose.xlu0.b32.cont [14/16] %v406, 128
        %731 = vxpose.xlu0.b32.cont [15/16] %v414, 128
        %732 = vxpose.xlu0.b32.end [16/16] %v422, 128
        %v733 = vpop.trf.xlu0
        %v734 = vpop.trf.xlu0
        %v735 = vpop.trf.xlu0
        %v736 = vpop.trf.xlu0
        %v737 = vpop.trf.xlu0
        %v738 = vpop.trf.xlu0
        %v739 = vpop.trf.xlu0
        %v740 = vpop.trf.xlu0
        %v741 = vpop.trf.xlu0
        %v742 = vpop.trf.xlu0
        %v743 = vpop.trf.xlu0
        %v744 = vpop.trf.xlu0
        %v745 = vpop.trf.xlu0
        %v746 = vpop.trf.xlu0
        %v747 = vpop.trf.xlu0
        %v748 = vpop.trf.xlu0
        %749 = vxpose.xlu0.b32.start [1/16] %v303, 128
        %750 = vxpose.xlu0.b32.cont [2/16] %v311, 128
        %751 = vxpose.xlu0.b32.cont [3/16] %v319, 128
        %752 = vxpose.xlu0.b32.cont [4/16] %v327, 128
        %753 = vxpose.xlu0.b32.cont [5/16] %v335, 128
        %754 = vxpose.xlu0.b32.cont [6/16] %v343, 128
        %755 = vxpose.xlu0.b32.cont [7/16] %v351, 128
        %756 = vxpose.xlu0.b32.cont [8/16] %v359, 128
        %757 = vxpose.xlu0.b32.cont [9/16] %v367, 128
        %758 = vxpose.xlu0.b32.cont [10/16] %v375, 128
        %759 = vxpose.xlu0.b32.cont [11/16] %v383, 128
        %760 = vxpose.xlu0.b32.cont [12/16] %v391, 128
        %761 = vxpose.xlu0.b32.cont [13/16] %v399, 128
        %762 = vxpose.xlu0.b32.cont [14/16] %v407, 128
        %763 = vxpose.xlu0.b32.cont [15/16] %v415, 128
        %764 = vxpose.xlu0.b32.end [16/16] %v423, 128
        %v765 = vpop.trf.xlu0
        %v766 = vpop.trf.xlu0
        %v767 = vpop.trf.xlu0
        %v768 = vpop.trf.xlu0
        %v769 = vpop.trf.xlu0
        %v770 = vpop.trf.xlu0
        %v771 = vpop.trf.xlu0
        %v772 = vpop.trf.xlu0
        %v773 = vpop.trf.xlu0
        %v774 = vpop.trf.xlu0
        %v775 = vpop.trf.xlu0
        %v776 = vpop.trf.xlu0
        %v777 = vpop.trf.xlu0
        %v778 = vpop.trf.xlu0
        %v779 = vpop.trf.xlu0
        %v780 = vpop.trf.xlu0
        %781 = vxpose.xlu0.b32.start [1/16] %v304, 128
        %782 = vxpose.xlu0.b32.cont [2/16] %v312, 128
        %783 = vxpose.xlu0.b32.cont [3/16] %v320, 128
        %784 = vxpose.xlu0.b32.cont [4/16] %v328, 128
        %785 = vxpose.xlu0.b32.cont [5/16] %v336, 128
        %786 = vxpose.xlu0.b32.cont [6/16] %v344, 128
        %787 = vxpose.xlu0.b32.cont [7/16] %v352, 128
        %788 = vxpose.xlu0.b32.cont [8/16] %v360, 128
        %789 = vxpose.xlu0.b32.cont [9/16] %v368, 128
        %790 = vxpose.xlu0.b32.cont [10/16] %v376, 128
        %791 = vxpose.xlu0.b32.cont [11/16] %v384, 128
        %792 = vxpose.xlu0.b32.cont [12/16] %v392, 128
        %793 = vxpose.xlu0.b32.cont [13/16] %v400, 128
        %794 = vxpose.xlu0.b32.cont [14/16] %v408, 128
        %795 = vxpose.xlu0.b32.cont [15/16] %v416, 128
        %796 = vxpose.xlu0.b32.end [16/16] %v424, 128
        %v797 = vpop.trf.xlu0
        %v798 = vpop.trf.xlu0
        %v799 = vpop.trf.xlu0
        %v800 = vpop.trf.xlu0
        %v801 = vpop.trf.xlu0
        %v802 = vpop.trf.xlu0
        %v803 = vpop.trf.xlu0
        %v804 = vpop.trf.xlu0
        %v805 = vpop.trf.xlu0
        %v806 = vpop.trf.xlu0
        %v807 = vpop.trf.xlu0
        %v808 = vpop.trf.xlu0
        %v809 = vpop.trf.xlu0
        %v810 = vpop.trf.xlu0
        %v811 = vpop.trf.xlu0
        %v812 = vpop.trf.xlu0
        %813 = vxpose.xlu0.b32.start [1/16] %v305, 128
        %814 = vxpose.xlu0.b32.cont [2/16] %v313, 128
        %815 = vxpose.xlu0.b32.cont [3/16] %v321, 128
        %816 = vxpose.xlu0.b32.cont [4/16] %v329, 128
        %817 = vxpose.xlu0.b32.cont [5/16] %v337, 128
        %818 = vxpose.xlu0.b32.cont [6/16] %v345, 128
        %819 = vxpose.xlu0.b32.cont [7/16] %v353, 128
        %820 = vxpose.xlu0.b32.cont [8/16] %v361, 128
        %821 = vxpose.xlu0.b32.cont [9/16] %v369, 128
        %822 = vxpose.xlu0.b32.cont [10/16] %v377, 128
        %823 = vxpose.xlu0.b32.cont [11/16] %v385, 128
        %824 = vxpose.xlu0.b32.cont [12/16] %v393, 128
        %825 = vxpose.xlu0.b32.cont [13/16] %v401, 128
        %826 = vxpose.xlu0.b32.cont [14/16] %v409, 128
        %827 = vxpose.xlu0.b32.cont [15/16] %v417, 128
        %828 = vxpose.xlu0.b32.end [16/16] %v425, 128
        %v829 = vpop.trf.xlu0
        %v830 = vpop.trf.xlu0
        %v831 = vpop.trf.xlu0
        %v832 = vpop.trf.xlu0
        %v833 = vpop.trf.xlu0
        %v834 = vpop.trf.xlu0
        %v835 = vpop.trf.xlu0
        %v836 = vpop.trf.xlu0
        %v837 = vpop.trf.xlu0
        %v838 = vpop.trf.xlu0
        %v839 = vpop.trf.xlu0
        %v840 = vpop.trf.xlu0
        %v841 = vpop.trf.xlu0
        %v842 = vpop.trf.xlu0
        %v843 = vpop.trf.xlu0
        %v844 = vpop.trf.xlu0
        %845 = vxpose.xlu0.b32.start [1/16] %v306, 128
        %846 = vxpose.xlu0.b32.cont [2/16] %v314, 128
        %847 = vxpose.xlu0.b32.cont [3/16] %v322, 128
        %848 = vxpose.xlu0.b32.cont [4/16] %v330, 128
        %849 = vxpose.xlu0.b32.cont [5/16] %v338, 128
        %850 = vxpose.xlu0.b32.cont [6/16] %v346, 128
        %851 = vxpose.xlu0.b32.cont [7/16] %v354, 128
        %852 = vxpose.xlu0.b32.cont [8/16] %v362, 128
        %853 = vxpose.xlu0.b32.cont [9/16] %v370, 128
        %854 = vxpose.xlu0.b32.cont [10/16] %v378, 128
        %855 = vxpose.xlu0.b32.cont [11/16] %v386, 128
        %856 = vxpose.xlu0.b32.cont [12/16] %v394, 128
        %857 = vxpose.xlu0.b32.cont [13/16] %v402, 128
        %858 = vxpose.xlu0.b32.cont [14/16] %v410, 128
        %859 = vxpose.xlu0.b32.cont [15/16] %v418, 128
        %860 = vxpose.xlu0.b32.end [16/16] %v426, 128
        %v861 = vpop.trf.xlu0
        %v862 = vpop.trf.xlu0
        %v863 = vpop.trf.xlu0
        %v864 = vpop.trf.xlu0
        %v865 = vpop.trf.xlu0
        %v866 = vpop.trf.xlu0
        %v867 = vpop.trf.xlu0
        %v868 = vpop.trf.xlu0
        %v869 = vpop.trf.xlu0
        %v870 = vpop.trf.xlu0
        %v871 = vpop.trf.xlu0
        %v872 = vpop.trf.xlu0
        %v873 = vpop.trf.xlu0
        %v874 = vpop.trf.xlu0
        %v875 = vpop.trf.xlu0
        %v876 = vpop.trf.xlu0
        %877 = vxpose.xlu0.b32.start [1/16] %v307, 128
        %878 = vxpose.xlu0.b32.cont [2/16] %v315, 128
        %879 = vxpose.xlu0.b32.cont [3/16] %v323, 128
        %880 = vxpose.xlu0.b32.cont [4/16] %v331, 128
        %881 = vxpose.xlu0.b32.cont [5/16] %v339, 128
        %882 = vxpose.xlu0.b32.cont [6/16] %v347, 128
        %883 = vxpose.xlu0.b32.cont [7/16] %v355, 128
        %884 = vxpose.xlu0.b32.cont [8/16] %v363, 128
        %885 = vxpose.xlu0.b32.cont [9/16] %v371, 128
        %886 = vxpose.xlu0.b32.cont [10/16] %v379, 128
        %887 = vxpose.xlu0.b32.cont [11/16] %v387, 128
        %888 = vxpose.xlu0.b32.cont [12/16] %v395, 128
        %889 = vxpose.xlu0.b32.cont [13/16] %v403, 128
        %890 = vxpose.xlu0.b32.cont [14/16] %v411, 128
        %891 = vxpose.xlu0.b32.cont [15/16] %v419, 128
        %892 = vxpose.xlu0.b32.end [16/16] %v427, 128
        %v893 = vpop.trf.xlu0
        %v894 = vpop.trf.xlu0
        %v895 = vpop.trf.xlu0
        %v896 = vpop.trf.xlu0
        %v897 = vpop.trf.xlu0
        %v898 = vpop.trf.xlu0
        %v899 = vpop.trf.xlu0
        %v900 = vpop.trf.xlu0
        %v901 = vpop.trf.xlu0
        %v902 = vpop.trf.xlu0
        %v903 = vpop.trf.xlu0
        %v904 = vpop.trf.xlu0
        %v905 = vpop.trf.xlu0
        %v906 = vpop.trf.xlu0
        %v907 = vpop.trf.xlu0
        %v908 = vpop.trf.xlu0
        %909 = vxpose.xlu0.b32.start [1/16] %v308, 128
        %910 = vxpose.xlu0.b32.cont [2/16] %v316, 128
        %911 = vxpose.xlu0.b32.cont [3/16] %v324, 128
        %912 = vxpose.xlu0.b32.cont [4/16] %v332, 128
        %913 = vxpose.xlu0.b32.cont [5/16] %v340, 128
        %914 = vxpose.xlu0.b32.cont [6/16] %v348, 128
        %915 = vxpose.xlu0.b32.cont [7/16] %v356, 128
        %916 = vxpose.xlu0.b32.cont [8/16] %v364, 128
        %917 = vxpose.xlu0.b32.cont [9/16] %v372, 128
        %918 = vxpose.xlu0.b32.cont [10/16] %v380, 128
        %919 = vxpose.xlu0.b32.cont [11/16] %v388, 128
        %920 = vxpose.xlu0.b32.cont [12/16] %v396, 128
        %921 = vxpose.xlu0.b32.cont [13/16] %v404, 128
        %922 = vxpose.xlu0.b32.cont [14/16] %v412, 128
        %923 = vxpose.xlu0.b32.cont [15/16] %v420, 128
        %924 = vxpose.xlu0.b32.end [16/16] %v428, 128
        %v925 = vpop.trf.xlu0
        %v926 = vpop.trf.xlu0
        %v927 = vpop.trf.xlu0
        %v928 = vpop.trf.xlu0
        %v929 = vpop.trf.xlu0
        %v930 = vpop.trf.xlu0
        %v931 = vpop.trf.xlu0
        %v932 = vpop.trf.xlu0
        %v933 = vpop.trf.xlu0
        %v934 = vpop.trf.xlu0
        %v935 = vpop.trf.xlu0
        %v936 = vpop.trf.xlu0
        %v937 = vpop.trf.xlu0
        %v938 = vpop.trf.xlu0
        %v939 = vpop.trf.xlu0
        %v940 = vpop.trf.xlu0
        %941 = vst [vmem:[%s168] sm:$0xff] %v445
        %942 = vst [vmem:[%s168 + $0x8] sm:$0xff] %v701
        %943 = vst [vmem:[%s168 + $0x10] sm:$0xff] %v446
        %944 = vst [vmem:[%s168 + $0x18] sm:$0xff] %v702
        %945 = vst [vmem:[%s168 + $0x20] sm:$0xff] %v447
        %946 = vst [vmem:[%s168 + $0x28] sm:$0xff] %v703
        %947 = vst [vmem:[%s168 + $0x30] sm:$0xff] %v448
        %948 = vst [vmem:[%s168 + $0x38] sm:$0xff] %v704
        %949 = vst [vmem:[%s168 + $0x40] sm:$0xff] %v449
        %950 = vst [vmem:[%s168 + $0x48] sm:$0xff] %v705
        %951 = vst [vmem:[%s168 + $0x50] sm:$0xff] %v450
        %952 = vst [vmem:[%s168 + $0x58] sm:$0xff] %v706
        %953 = vst [vmem:[%s168 + $0x60] sm:$0xff] %v451
        %954 = vst [vmem:[%s168 + $0x68] sm:$0xff] %v707
        %955 = vst [vmem:[%s168 + $0x70] sm:$0xff] %v452
        %956 = vst [vmem:[%s168 + $0x78] sm:$0xff] %v708
        %957 = vst [vmem:[%s168 + $0x80] sm:$0xff] %v453
        %958 = vst [vmem:[%s168 + $0x88] sm:$0xff] %v709
        %959 = vst [vmem:[%s168 + $0x90] sm:$0xff] %v454
        %960 = vst [vmem:[%s168 + $0x98] sm:$0xff] %v710
        %961 = vst [vmem:[%s168 + $0xa0] sm:$0xff] %v455
        %962 = vst [vmem:[%s168 + $0xa8] sm:$0xff] %v711
        %963 = vst [vmem:[%s168 + $0xb0] sm:$0xff] %v456
        %964 = vst [vmem:[%s168 + $0xb8] sm:$0xff] %v712
        %965 = vst [vmem:[%s168 + $0xc0] sm:$0xff] %v457
        %966 = vst [vmem:[%s168 + $0xc8] sm:$0xff] %v713
        %967 = vst [vmem:[%s168 + $0xd0] sm:$0xff] %v458
        %968 = vst [vmem:[%s168 + $0xd8] sm:$0xff] %v714
        %969 = vst [vmem:[%s168 + $0xe0] sm:$0xff] %v459
        %970 = vst [vmem:[%s168 + $0xe8] sm:$0xff] %v715
        %971 = vst [vmem:[%s168 + $0xf0] sm:$0xff] %v460
        %972 = vst [vmem:[%s168 + $0xf8] sm:$0xff] %v716
        %973 = vst [vmem:[%s168 + $0x100] sm:$0xff] %v477
        %974 = vst [vmem:[%s168 + $0x108] sm:$0xff] %v733
        %975 = vst [vmem:[%s168 + $0x110] sm:$0xff] %v478
        %976 = vst [vmem:[%s168 + $0x118] sm:$0xff] %v734
        %977 = vst [vmem:[%s168 + $0x120] sm:$0xff] %v479
        %978 = vst [vmem:[%s168 + $0x128] sm:$0xff] %v735
        %979 = vst [vmem:[%s168 + $0x130] sm:$0xff] %v480
        %980 = vst [vmem:[%s168 + $0x138] sm:$0xff] %v736
        %981 = vst [vmem:[%s168 + $0x140] sm:$0xff] %v481
        %982 = vst [vmem:[%s168 + $0x148] sm:$0xff] %v737
        %983 = vst [vmem:[%s168 + $0x150] sm:$0xff] %v482
        %984 = vst [vmem:[%s168 + $0x158] sm:$0xff] %v738
        %985 = vst [vmem:[%s168 + $0x160] sm:$0xff] %v483
        %986 = vst [vmem:[%s168 + $0x168] sm:$0xff] %v739
        %987 = vst [vmem:[%s168 + $0x170] sm:$0xff] %v484
        %988 = vst [vmem:[%s168 + $0x178] sm:$0xff] %v740
        %989 = vst [vmem:[%s168 + $0x180] sm:$0xff] %v485
        %990 = vst [vmem:[%s168 + $0x188] sm:$0xff] %v741
        %991 = vst [vmem:[%s168 + $0x190] sm:$0xff] %v486
        %992 = vst [vmem:[%s168 + $0x198] sm:$0xff] %v742
        %993 = vst [vmem:[%s168 + $0x1a0] sm:$0xff] %v487
        %994 = vst [vmem:[%s168 + $0x1a8] sm:$0xff] %v743
        %995 = vst [vmem:[%s168 + $0x1b0] sm:$0xff] %v488
        %996 = vst [vmem:[%s168 + $0x1b8] sm:$0xff] %v744
        %997 = vst [vmem:[%s168 + $0x1c0] sm:$0xff] %v489
        %998 = vst [vmem:[%s168 + $0x1c8] sm:$0xff] %v745
        %999 = vst [vmem:[%s168 + $0x1d0] sm:$0xff] %v490
        %1000 = vst [vmem:[%s168 + $0x1d8] sm:$0xff] %v746
        %1001 = vst [vmem:[%s168 + $0x1e0] sm:$0xff] %v491
        %1002 = vst [vmem:[%s168 + $0x1e8] sm:$0xff] %v747
        %1003 = vst [vmem:[%s168 + $0x1f0] sm:$0xff] %v492
        %1004 = vst [vmem:[%s168 + $0x1f8] sm:$0xff] %v748
        %1005 = vst [vmem:[%s168 + $0x200] sm:$0xff] %v509
        %1006 = vst [vmem:[%s168 + $0x208] sm:$0xff] %v765
        %1007 = vst [vmem:[%s168 + $0x210] sm:$0xff] %v510
        %1008 = vst [vmem:[%s168 + $0x218] sm:$0xff] %v766
        %1009 = vst [vmem:[%s168 + $0x220] sm:$0xff] %v511
        %1010 = vst [vmem:[%s168 + $0x228] sm:$0xff] %v767
        %1011 = vst [vmem:[%s168 + $0x230] sm:$0xff] %v512
        %1012 = vst [vmem:[%s168 + $0x238] sm:$0xff] %v768
        %1013 = vst [vmem:[%s168 + $0x240] sm:$0xff] %v513
        %1014 = vst [vmem:[%s168 + $0x248] sm:$0xff] %v769
        %1015 = vst [vmem:[%s168 + $0x250] sm:$0xff] %v514
        %1016 = vst [vmem:[%s168 + $0x258] sm:$0xff] %v770
        %1017 = vst [vmem:[%s168 + $0x260] sm:$0xff] %v515
        %1018 = vst [vmem:[%s168 + $0x268] sm:$0xff] %v771
        %1019 = vst [vmem:[%s168 + $0x270] sm:$0xff] %v516
        %1020 = vst [vmem:[%s168 + $0x278] sm:$0xff] %v772
        %1021 = vst [vmem:[%s168 + $0x280] sm:$0xff] %v517
        %1022 = vst [vmem:[%s168 + $0x288] sm:$0xff] %v773
        %1023 = vst [vmem:[%s168 + $0x290] sm:$0xff] %v518
        %1024 = vst [vmem:[%s168 + $0x298] sm:$0xff] %v774
        %1025 = vst [vmem:[%s168 + $0x2a0] sm:$0xff] %v519
        %1026 = vst [vmem:[%s168 + $0x2a8] sm:$0xff] %v775
        %1027 = vst [vmem:[%s168 + $0x2b0] sm:$0xff] %v520
        %1028 = vst [vmem:[%s168 + $0x2b8] sm:$0xff] %v776
        %1029 = vst [vmem:[%s168 + $0x2c0] sm:$0xff] %v521
        %1030 = vst [vmem:[%s168 + $0x2c8] sm:$0xff] %v777
        %1031 = vst [vmem:[%s168 + $0x2d0] sm:$0xff] %v522
        %1032 = vst [vmem:[%s168 + $0x2d8] sm:$0xff] %v778
        %1033 = vst [vmem:[%s168 + $0x2e0] sm:$0xff] %v523
        %1034 = vst [vmem:[%s168 + $0x2e8] sm:$0xff] %v779
        %1035 = vst [vmem:[%s168 + $0x2f0] sm:$0xff] %v524
        %1036 = vst [vmem:[%s168 + $0x2f8] sm:$0xff] %v780
        %1037 = vst [vmem:[%s168 + $0x300] sm:$0xff] %v541
        %1038 = vst [vmem:[%s168 + $0x308] sm:$0xff] %v797
        %1039 = vst [vmem:[%s168 + $0x310] sm:$0xff] %v542
        %1040 = vst [vmem:[%s168 + $0x318] sm:$0xff] %v798
        %1041 = vst [vmem:[%s168 + $0x320] sm:$0xff] %v543
        %1042 = vst [vmem:[%s168 + $0x328] sm:$0xff] %v799
        %1043 = vst [vmem:[%s168 + $0x330] sm:$0xff] %v544
        %1044 = vst [vmem:[%s168 + $0x338] sm:$0xff] %v800
        %1045 = vst [vmem:[%s168 + $0x340] sm:$0xff] %v545
        %1046 = vst [vmem:[%s168 + $0x348] sm:$0xff] %v801
        %1047 = vst [vmem:[%s168 + $0x350] sm:$0xff] %v546
        %1048 = vst [vmem:[%s168 + $0x358] sm:$0xff] %v802
        %1049 = vst [vmem:[%s168 + $0x360] sm:$0xff] %v547
        %1050 = vst [vmem:[%s168 + $0x368] sm:$0xff] %v803
        %1051 = vst [vmem:[%s168 + $0x370] sm:$0xff] %v548
        %1052 = vst [vmem:[%s168 + $0x378] sm:$0xff] %v804
        %1053 = vst [vmem:[%s168 + $0x380] sm:$0xff] %v549
        %1054 = vst [vmem:[%s168 + $0x388] sm:$0xff] %v805
        %1055 = vst [vmem:[%s168 + $0x390] sm:$0xff] %v550
        %1056 = vst [vmem:[%s168 + $0x398] sm:$0xff] %v806
        %1057 = vst [vmem:[%s168 + $0x3a0] sm:$0xff] %v551
        %1058 = vst [vmem:[%s168 + $0x3a8] sm:$0xff] %v807
        %1059 = vst [vmem:[%s168 + $0x3b0] sm:$0xff] %v552
        %1060 = vst [vmem:[%s168 + $0x3b8] sm:$0xff] %v808
        %1061 = vst [vmem:[%s168 + $0x3c0] sm:$0xff] %v553
        %1062 = vst [vmem:[%s168 + $0x3c8] sm:$0xff] %v809
        %1063 = vst [vmem:[%s168 + $0x3d0] sm:$0xff] %v554
        %1064 = vst [vmem:[%s168 + $0x3d8] sm:$0xff] %v810
        %1065 = vst [vmem:[%s168 + $0x3e0] sm:$0xff] %v555
        %1066 = vst [vmem:[%s168 + $0x3e8] sm:$0xff] %v811
        %1067 = vst [vmem:[%s168 + $0x3f0] sm:$0xff] %v556
        %1068 = vst [vmem:[%s168 + $0x3f8] sm:$0xff] %v812
        %1069 = vst [vmem:[%s168 + $0x400] sm:$0xff] %v573
        %1070 = vst [vmem:[%s168 + $0x408] sm:$0xff] %v829
        %1071 = vst [vmem:[%s168 + $0x410] sm:$0xff] %v574
        %1072 = vst [vmem:[%s168 + $0x418] sm:$0xff] %v830
        %1073 = vst [vmem:[%s168 + $0x420] sm:$0xff] %v575
        %1074 = vst [vmem:[%s168 + $0x428] sm:$0xff] %v831
        %1075 = vst [vmem:[%s168 + $0x430] sm:$0xff] %v576
        %1076 = vst [vmem:[%s168 + $0x438] sm:$0xff] %v832
        %1077 = vst [vmem:[%s168 + $0x440] sm:$0xff] %v577
        %1078 = vst [vmem:[%s168 + $0x448] sm:$0xff] %v833
        %1079 = vst [vmem:[%s168 + $0x450] sm:$0xff] %v578
        %1080 = vst [vmem:[%s168 + $0x458] sm:$0xff] %v834
        %1081 = vst [vmem:[%s168 + $0x460] sm:$0xff] %v579
        %1082 = vst [vmem:[%s168 + $0x468] sm:$0xff] %v835
        %1083 = vst [vmem:[%s168 + $0x470] sm:$0xff] %v580
        %1084 = vst [vmem:[%s168 + $0x478] sm:$0xff] %v836
        %1085 = vst [vmem:[%s168 + $0x480] sm:$0xff] %v581
        %1086 = vst [vmem:[%s168 + $0x488] sm:$0xff] %v837
        %1087 = vst [vmem:[%s168 + $0x490] sm:$0xff] %v582
        %1088 = vst [vmem:[%s168 + $0x498] sm:$0xff] %v838
        %1089 = vst [vmem:[%s168 + $0x4a0] sm:$0xff] %v583
        %1090 = vst [vmem:[%s168 + $0x4a8] sm:$0xff] %v839
        %1091 = vst [vmem:[%s168 + $0x4b0] sm:$0xff] %v584
        %1092 = vst [vmem:[%s168 + $0x4b8] sm:$0xff] %v840
        %1093 = vst [vmem:[%s168 + $0x4c0] sm:$0xff] %v585
        %1094 = vst [vmem:[%s168 + $0x4c8] sm:$0xff] %v841
        %1095 = vst [vmem:[%s168 + $0x4d0] sm:$0xff] %v586
        %1096 = vst [vmem:[%s168 + $0x4d8] sm:$0xff] %v842
        %1097 = vst [vmem:[%s168 + $0x4e0] sm:$0xff] %v587
        %1098 = vst [vmem:[%s168 + $0x4e8] sm:$0xff] %v843
        %1099 = vst [vmem:[%s168 + $0x4f0] sm:$0xff] %v588
        %1100 = vst [vmem:[%s168 + $0x4f8] sm:$0xff] %v844
        %1101 = vst [vmem:[%s168 + $0x500] sm:$0xff] %v605
        %1102 = vst [vmem:[%s168 + $0x508] sm:$0xff] %v861
        %1103 = vst [vmem:[%s168 + $0x510] sm:$0xff] %v606
        %1104 = vst [vmem:[%s168 + $0x518] sm:$0xff] %v862
        %1105 = vst [vmem:[%s168 + $0x520] sm:$0xff] %v607
        %1106 = vst [vmem:[%s168 + $0x528] sm:$0xff] %v863
        %1107 = vst [vmem:[%s168 + $0x530] sm:$0xff] %v608
        %1108 = vst [vmem:[%s168 + $0x538] sm:$0xff] %v864
        %1109 = vst [vmem:[%s168 + $0x540] sm:$0xff] %v609
        %1110 = vst [vmem:[%s168 + $0x548] sm:$0xff] %v865
        %1111 = vst [vmem:[%s168 + $0x550] sm:$0xff] %v610
        %1112 = vst [vmem:[%s168 + $0x558] sm:$0xff] %v866
        %1113 = vst [vmem:[%s168 + $0x560] sm:$0xff] %v611
        %1114 = vst [vmem:[%s168 + $0x568] sm:$0xff] %v867
        %1115 = vst [vmem:[%s168 + $0x570] sm:$0xff] %v612
        %1116 = vst [vmem:[%s168 + $0x578] sm:$0xff] %v868
        %1117 = vst [vmem:[%s168 + $0x580] sm:$0xff] %v613
        %1118 = vst [vmem:[%s168 + $0x588] sm:$0xff] %v869
        %1119 = vst [vmem:[%s168 + $0x590] sm:$0xff] %v614
        %1120 = vst [vmem:[%s168 + $0x598] sm:$0xff] %v870
        %1121 = vst [vmem:[%s168 + $0x5a0] sm:$0xff] %v615
        %1122 = vst [vmem:[%s168 + $0x5a8] sm:$0xff] %v871
        %1123 = vst [vmem:[%s168 + $0x5b0] sm:$0xff] %v616
        %1124 = vst [vmem:[%s168 + $0x5b8] sm:$0xff] %v872
        %1125 = vst [vmem:[%s168 + $0x5c0] sm:$0xff] %v617
        %1126 = vst [vmem:[%s168 + $0x5c8] sm:$0xff] %v873
        %1127 = vst [vmem:[%s168 + $0x5d0] sm:$0xff] %v618
        %1128 = vst [vmem:[%s168 + $0x5d8] sm:$0xff] %v874
        %1129 = vst [vmem:[%s168 + $0x5e0] sm:$0xff] %v619
        %1130 = vst [vmem:[%s168 + $0x5e8] sm:$0xff] %v875
        %1131 = vst [vmem:[%s168 + $0x5f0] sm:$0xff] %v620
        %1132 = vst [vmem:[%s168 + $0x5f8] sm:$0xff] %v876
        %1133 = vst [vmem:[%s168 + $0x600] sm:$0xff] %v637
        %1134 = vst [vmem:[%s168 + $0x608] sm:$0xff] %v893
        %1135 = vst [vmem:[%s168 + $0x610] sm:$0xff] %v638
        %1136 = vst [vmem:[%s168 + $0x618] sm:$0xff] %v894
        %1137 = vst [vmem:[%s168 + $0x620] sm:$0xff] %v639
        %1138 = vst [vmem:[%s168 + $0x628] sm:$0xff] %v895
        %1139 = vst [vmem:[%s168 + $0x630] sm:$0xff] %v640
        %1140 = vst [vmem:[%s168 + $0x638] sm:$0xff] %v896
        %1141 = vst [vmem:[%s168 + $0x640] sm:$0xff] %v641
        %1142 = vst [vmem:[%s168 + $0x648] sm:$0xff] %v897
        %1143 = vst [vmem:[%s168 + $0x650] sm:$0xff] %v642
        %1144 = vst [vmem:[%s168 + $0x658] sm:$0xff] %v898
        %1145 = vst [vmem:[%s168 + $0x660] sm:$0xff] %v643
        %1146 = vst [vmem:[%s168 + $0x668] sm:$0xff] %v899
        %1147 = vst [vmem:[%s168 + $0x670] sm:$0xff] %v644
        %1148 = vst [vmem:[%s168 + $0x678] sm:$0xff] %v900
        %1149 = vst [vmem:[%s168 + $0x680] sm:$0xff] %v645
        %1150 = vst [vmem:[%s168 + $0x688] sm:$0xff] %v901
        %1151 = vst [vmem:[%s168 + $0x690] sm:$0xff] %v646
        %1152 = vst [vmem:[%s168 + $0x698] sm:$0xff] %v902
        %1153 = vst [vmem:[%s168 + $0x6a0] sm:$0xff] %v647
        %1154 = vst [vmem:[%s168 + $0x6a8] sm:$0xff] %v903
        %1155 = vst [vmem:[%s168 + $0x6b0] sm:$0xff] %v648
        %1156 = vst [vmem:[%s168 + $0x6b8] sm:$0xff] %v904
        %1157 = vst [vmem:[%s168 + $0x6c0] sm:$0xff] %v649
        %1158 = vst [vmem:[%s168 + $0x6c8] sm:$0xff] %v905
        %1159 = vst [vmem:[%s168 + $0x6d0] sm:$0xff] %v650
        %1160 = vst [vmem:[%s168 + $0x6d8] sm:$0xff] %v906
        %1161 = vst [vmem:[%s168 + $0x6e0] sm:$0xff] %v651
        %1162 = vst [vmem:[%s168 + $0x6e8] sm:$0xff] %v907
        %1163 = vst [vmem:[%s168 + $0x6f0] sm:$0xff] %v652
        %1164 = vst [vmem:[%s168 + $0x6f8] sm:$0xff] %v908
        %1165 = vst [vmem:[%s168 + $0x700] sm:$0xff] %v669
        %1166 = vst [vmem:[%s168 + $0x708] sm:$0xff] %v925
        %1167 = vst [vmem:[%s168 + $0x710] sm:$0xff] %v670
        %1168 = vst [vmem:[%s168 + $0x718] sm:$0xff] %v926
        %1169 = vst [vmem:[%s168 + $0x720] sm:$0xff] %v671
        %1170 = vst [vmem:[%s168 + $0x728] sm:$0xff] %v927
        %1171 = vst [vmem:[%s168 + $0x730] sm:$0xff] %v672
        %1172 = vst [vmem:[%s168 + $0x738] sm:$0xff] %v928
        %1173 = vst [vmem:[%s168 + $0x740] sm:$0xff] %v673
        %1174 = vst [vmem:[%s168 + $0x748] sm:$0xff] %v929
        %1175 = vst [vmem:[%s168 + $0x750] sm:$0xff] %v674
        %1176 = vst [vmem:[%s168 + $0x758] sm:$0xff] %v930
        %1177 = vst [vmem:[%s168 + $0x760] sm:$0xff] %v675
        %1178 = vst [vmem:[%s168 + $0x768] sm:$0xff] %v931
        %1179 = vst [vmem:[%s168 + $0x770] sm:$0xff] %v676
        %1180 = vst [vmem:[%s168 + $0x778] sm:$0xff] %v932
        %1181 = vst [vmem:[%s168 + $0x780] sm:$0xff] %v677
        %1182 = vst [vmem:[%s168 + $0x788] sm:$0xff] %v933
        %1183 = vst [vmem:[%s168 + $0x790] sm:$0xff] %v678
        %1184 = vst [vmem:[%s168 + $0x798] sm:$0xff] %v934
        %1185 = vst [vmem:[%s168 + $0x7a0] sm:$0xff] %v679
        %1186 = vst [vmem:[%s168 + $0x7a8] sm:$0xff] %v935
        %1187 = vst [vmem:[%s168 + $0x7b0] sm:$0xff] %v680
        %1188 = vst [vmem:[%s168 + $0x7b8] sm:$0xff] %v936
        %1189 = vst [vmem:[%s168 + $0x7c0] sm:$0xff] %v681
        %1190 = vst [vmem:[%s168 + $0x7c8] sm:$0xff] %v937
        %1191 = vst [vmem:[%s168 + $0x7d0] sm:$0xff] %v682
        %1192 = vst [vmem:[%s168 + $0x7d8] sm:$0xff] %v938
        %1193 = vst [vmem:[%s168 + $0x7e0] sm:$0xff] %v683
        %1194 = vst [vmem:[%s168 + $0x7e8] sm:$0xff] %v939
        %1195 = vst [vmem:[%s168 + $0x7f0] sm:$0xff] %v684
        %1196 = vst [vmem:[%s168 + $0x7f8] sm:$0xff] %v940
        %s1197 = sand.u32 %s79, 1
        %s1198 = scalar_lea.sflag [#allocation4], %s1197
        %s1199 = sand.u32 %s79, 1
        %s1200 = smul.addr %s1199, 2048
        %s1201 = scalar_lea.vmem [#allocation5], %s1200
        // Predicated region
        $region29: #{tpu_custom_call.1} parent=23 // pred_check
          %p1202 = pneg %p89
        $region30: #{tpu_custom_call.1} parent=23 // pred_check_branch
          %1204 = sbr.rel (%p1202) target = $region32
        $region31: #{tpu_custom_call.1} parent=23 // pred_region
          %s1205 = smul.u32 128, %s24
          %s1206 = smul.u32 2, %s25
          %1208 = vsyncadd %s1198, 0
          %s1209 = smul.addr %s1205, 4
          %s1210 = sadd.s32 %s1206, %s1209
          %s1211 = smul.addr %s23, 512
          %s1212 = sadd.s32 %s1210, %s1211
          %s1213 = smul.addr %s1212, 8
          %s1214 = scalar_lea.hbm %s1, %s1213
          %s1215 = sshll.u32 %s1201, 4
          %s1216 = int_to_ptr.vmem [resolvable:$true] %s1215
          %s1217 = sshll.u32 %s1214, 4
          %s1218 = int_to_ptr.hbm [resolvable:$true] %s1217
          %1223 = dma.vmem_to_hbm [thread:$0]  %s1216, 32768, %s1218, %s1198, 256, 512, 16
        $region32: #{tpu_custom_call.1} parent=23 // pred_fallthru
          _
      $region24: #{tpu_custom_call.1} parent=5 // pred_fallthru
        _
      %p1224 = scmp.le.s32.totalorder 2, %s13
      // Predicated region
      $region33: #{tpu_custom_call.1} parent=5 // pred_check
        %p1225 = pneg %p1224
      $region34: #{tpu_custom_call.1} parent=5 // pred_check_branch
        %1227 = sbr.rel (%p1225) target = $region36
      $region35: #{tpu_custom_call.1} parent=5 // pred_region
        %s1228 = ssub.s32 %s13, 2
        // Predicated region
        $region37: #{tpu_custom_call.1} parent=35 // pred_check
          %p1229 = pneg %p95
        $region38: #{tpu_custom_call.1} parent=35 // pred_check_branch
          %1231 = sbr.rel (%p1229) target = $region40
        $region39: #{tpu_custom_call.1} parent=35 // pred_region
          %s1232 = sand.u32 %s80, 1
          %s1233 = scalar_lea.sflag [#allocation4], %s1232
          %s1234 = sand.u32 %s80, 1
          %s1235 = smul.addr %s1234, 2048
          %s1236 = scalar_lea.vmem [#allocation5], %s1235
          %1238 = dma.done %s1233, 32768
        $region40: #{tpu_custom_call.1} parent=35 // pred_fallthru
          _
      $region36: #{tpu_custom_call.1} parent=5 // pred_fallthru
        _
    $region6: #{tpu_custom_call.1} parent=1 // loop_footer
      %s17 = sadd.s32 1, %s13
    $region7: #{tpu_custom_call.1} parent=1 // loop_footer_branch
      %12 = sbr.rel target = $region3
    $region8: #{tpu_custom_call.1} parent=1 // loop_exit
      _
    %1239 = vsyncpa [#allocation3], 1
    %s1240 = scalar_lea.sflag [#allocation3], 1
    %1241 = vsyncpa %s1240, 1
    %1242 = vsyncpa [#allocation4], 1
    %s1243 = scalar_lea.sflag [#allocation4], 1
    %1244 = vsyncpa %s1243, 1

</llo_original>
